<compile_context>
chip_gen: v7x
topology: tpu7x:2x2x1
jax: 0.10.0
libtpu: 0.0.40
codegen_flags: <defaults>
</compile_context>

<pallas_src>
import jax
import jax.numpy as jnp
from jax.experimental import pallas as pl
from jax.experimental.pallas import tpu as pltpu

IN_FEATURES = 2
OUT_FEATURES = 5

# Rows (batch elements) per grid step.  Block footprint is
# (IN + OUT) * rows * 4 B = 28 B/row, double-buffered -> 56 B/row, so 128K rows
# ~= 7.2 MiB: comfortably inside every generation's scoped-VMEM default while
# keeping the per-step DMA time 5-10x the ~0.35 us step overhead.
_DEFAULT_TILE_ROWS = 128 * 1024

# Heuristic only: below this a fused XLA matmul wins on launch overhead (and,
# with the [N,2]/[N,5] contract's transpose passes, possibly above it too --
# re-measure per chip before relying on the Pallas path here).
_PALLAS_MIN_ROWS = 4096


def _round_up(x, m):
    return (x + m - 1) // m * m


def _linear_kernel(w_ref, b_ref, x_ref, o_ref):
    """One batch tile of the lane-transposed linear layer.

    w_ref: [OUT*IN]       f32 SMEM (PyTorch weight [OUT, IN], row-major flat)
    b_ref: [OUT]          f32 SMEM
    x_ref: [IN,  B, 128]  f32 VMEM (batch on sublane-group x lane axes)
    o_ref: [OUT, B, 128]  f32 VMEM
    """
    x0 = x_ref[0]                     # [B, 128], fully dense vregs
    x1 = x_ref[1]                     # [B, 128]
    # K=2 / OUT=5 contraction fully unrolled on the VPU: two broadcast
    # multiply-adds + bias per output feature.  Keep off the MXU.
    for j in range(OUT_FEATURES):
        w0 = w_ref[j * IN_FEATURES + 0]
        w1 = w_ref[j * IN_FEATURES + 1]
        o_ref[j] = x0 * w0 + x1 * w1 + b_ref[j]


def _choose_block_sublanes(num_groups, tile_rows):
    """Pick B = number of 128-row lane groups per grid step.

    Constraints: B must be a multiple of 8 OR equal num_groups (the (8,128)
    rule on the second-minor block dim), fit the tile_rows VMEM budget, and --
    when the whole problem would otherwise be one grid step -- leave >= 2
    steps so dimension_semantics=("parallel",) can use both v7x TensorCores.
    """
    b_max = max(1, tile_rows // 128)
    if b_max >= num_groups:
        if num_groups >= 16:
            half = _round_up(pl.cdiv(num_groups, 2), 8)
            if half < num_groups:
                return half
        return num_groups
    b = (b_max // 8) * 8
    if b < 8:
        return num_groups   # degenerate tile request: take the whole array
    return b


def h_fully_connected_t(x_t, weight, bias, *, tile_rows=_DEFAULT_TILE_ROWS):
    """Lane-dense fast path: x_t [2, N] f32 -> [5, N] f32 (= W @ x_t + b).

    This layout lets the kernel sit on the HBM roofline (28 B/row, no wrapper
    transpose passes).  Prefer it when the producer / consumer can adopt (or
    fuse to) the transposed layout.
    """
    in_f, n = x_t.shape
    if in_f != IN_FEATURES:
        raise ValueError(f"expected [{IN_FEATURES}, N] input, got {x_t.shape}")

    n_pad = _round_up(max(n, 1), 128)          # pad to a lane multiple only
    num_groups = n_pad // 128
    blk = _choose_block_sublanes(num_groups, tile_rows)
    grid = (pl.cdiv(num_groups, blk),)         # ragged last block is masked

    x_t = x_t.astype(jnp.float32)
    if n_pad != n:
        x_t = jnp.pad(x_t, ((0, 0), (0, n_pad - n)))
    x3 = x_t.reshape(IN_FEATURES, num_groups, 128)       # free view

    w_flat = weight.reshape(-1).astype(jnp.float32)       # [OUT*IN] -> SMEM
    b_flat = bias.reshape(-1).astype(jnp.float32)         # [OUT]    -> SMEM

    out3 = pl.pallas_call(
        _linear_kernel,
        out_shape=jax.ShapeDtypeStruct((OUT_FEATURES, num_groups, 128),
                                       jnp.float32),
        grid=grid,
        in_specs=[
            pl.BlockSpec(memory_space=pltpu.MemorySpace.SMEM),   # weights
            pl.BlockSpec(memory_space=pltpu.MemorySpace.SMEM),   # bias
            pl.BlockSpec((IN_FEATURES, blk, 128), lambda i: (0, i, 0)),
        ],
        out_specs=pl.BlockSpec((OUT_FEATURES, blk, 128), lambda i: (0, i, 0)),
        compiler_params=pltpu.CompilerParams(
            dimension_semantics=("parallel",),   # shard batch tiles across TCs
        ),
    )(w_flat, b_flat, x3)

    out_t = out3.reshape(OUT_FEATURES, n_pad)
    return out_t if n_pad == n else out_t[:, :n]


def h_fully_connected(x, weight, bias, *, tile_rows=_DEFAULT_TILE_ROWS,
                      force_pallas=False):
    """Forward pass of H_fully_connected: x [N, 2] -> [N, 5] (x @ W.T + b).

    Keeps the original module contract.  NOTE: this contract forces a
    transpose pass on each side of the lane-dense kernel (~3x the kernel's own
    HBM traffic); callers that can should use h_fully_connected_t directly or
    fuse these transposes into the producing / consuming op.
    """
    n = x.shape[0]
    if n < _PALLAS_MIN_ROWS and not force_pallas:
        # Tiny batches: a fused XLA matmul beats kernel-launch overhead.
        return x.astype(jnp.float32) @ weight.T.astype(jnp.float32) + bias
    out_t = h_fully_connected_t(x.T, weight, bias, tile_rows=tile_rows)
    return out_t.T


if __name__ == "__main__":
    key = jax.random.PRNGKey(0)
    kx, kw, kb = jax.random.split(key, 3)

    # Deterministic synthetic parameters matching nn.Linear(2, 5) shapes.
    weight = jax.random.normal(kw, (OUT_FEATURES, IN_FEATURES), dtype=jnp.float32)
    bias = jax.random.normal(kb, (OUT_FEATURES,), dtype=jnp.float32)

    # n=1000 exercises the pad-to-128 path with a single-step grid.
    n1 = 1000
    x1 = jax.random.normal(kx, (n1, IN_FEATURES), dtype=jnp.float32)
    out1 = jax.block_until_ready(
        h_fully_connected(x1, weight, bias, force_pallas=True))
    ref1 = x1 @ weight.T + bias
    assert out1.shape == (n1, OUT_FEATURES)
    assert jnp.allclose(out1, ref1, atol=1e-5, rtol=1e-5)

    # n=2200 with a 1024-row tile exercises a multi-step cdiv grid whose last
    # block is ragged (18 lane groups / 8 per step -> 3 steps, last partial).
    n2 = 2200
    x2 = jax.random.normal(jax.random.fold_in(kx, 1), (n2, IN_FEATURES),
                           dtype=jnp.float32)
    out2 = jax.block_until_ready(
        h_fully_connected(x2, weight, bias, tile_rows=1024, force_pallas=True))
    ref2 = x2 @ weight.T + bias
    assert out2.shape == (n2, OUT_FEATURES)
    assert jnp.allclose(out2, ref2, atol=1e-5, rtol=1e-5)

    print("KERNEL_OK")
</pallas_src>

<mosaic_0001>
module attributes {stable_mosaic.version = 11 : i64} {
  func.func @_linear_kernel(%arg0: i32, %arg1: memref<10xf32, #tpu.memory_space<smem>>, %arg2: memref<5xf32, #tpu.memory_space<smem>>, %arg3: memref<2x8x128xf32, #tpu.memory_space<vmem>>, %arg4: memref<5x8x128xf32, #tpu.memory_space<vmem>>) attributes {dimension_semantics = [#tpu.dimension_semantics<parallel>], iteration_bounds = array<i64: 1>, scalar_prefetch = 0 : i64, scratch_operands = 0 : i64, tpu.core_type = #tpu.core_type<tc>, window_params = [{transform_indices = @transform_0, window_bounds = array<i64: 10>}, {transform_indices = @transform_1, window_bounds = array<i64: 5>}, {transform_indices = @transform_2, window_bounds = array<i64: 2, 8, 128>}, {transform_indices = @transform_3, window_bounds = array<i64: 5, 8, 128>}]} {
    %c0 = arith.constant 0 : index
    %c0_0 = arith.constant 0 : index
    %c0_1 = arith.constant 0 : index
    %0 = vector.load %arg3[%c0, %c0_0, %c0_1] : memref<2x8x128xf32, #tpu.memory_space<vmem>>, vector<1x8x128xf32>
    %1 = vector.shape_cast %0 : vector<1x8x128xf32> to vector<8x128xf32>
    %c1 = arith.constant 1 : index
    %c0_2 = arith.constant 0 : index
    %c0_3 = arith.constant 0 : index
    %2 = vector.load %arg3[%c1, %c0_2, %c0_3] : memref<2x8x128xf32, #tpu.memory_space<vmem>>, vector<1x8x128xf32>
    %3 = vector.shape_cast %2 : vector<1x8x128xf32> to vector<8x128xf32>
    %c0_4 = arith.constant 0 : index
    %4 = memref.load %arg1[%c0_4] : memref<10xf32, #tpu.memory_space<smem>>
    %c1_5 = arith.constant 1 : index
    %5 = memref.load %arg1[%c1_5] : memref<10xf32, #tpu.memory_space<smem>>
    %6 = vector.broadcast %4 : f32 to vector<8x128xf32>
    %7 = arith.mulf %1, %6 : vector<8x128xf32>
    %8 = vector.broadcast %5 : f32 to vector<8x128xf32>
    %9 = arith.mulf %3, %8 : vector<8x128xf32>
    %10 = arith.addf %7, %9 : vector<8x128xf32>
    %c0_6 = arith.constant 0 : index
    %11 = memref.load %arg2[%c0_6] : memref<5xf32, #tpu.memory_space<smem>>
    %12 = vector.broadcast %11 : f32 to vector<8x128xf32>
    %13 = arith.addf %10, %12 : vector<8x128xf32>
    %c0_7 = arith.constant 0 : index
    %c0_8 = arith.constant 0 : index
    %c0_9 = arith.constant 0 : index
    %14 = vector.load %arg4[%c0_7, %c0_8, %c0_9] : memref<5x8x128xf32, #tpu.memory_space<vmem>>, vector<1x8x128xf32>
    %15 = vector.shape_cast %14 : vector<1x8x128xf32> to vector<8x128xf32>
    %16 = vector.shape_cast %13 : vector<8x128xf32> to vector<1x8x128xf32>
    tpu.vector_store %arg4[%c0_7, %c0_8, %c0_9], %16 {strides = array<i32>} : memref<5x8x128xf32, #tpu.memory_space<vmem>>, vector<1x8x128xf32>,
    %c2 = arith.constant 2 : index
    %17 = memref.load %arg1[%c2] : memref<10xf32, #tpu.memory_space<smem>>
    %c3 = arith.constant 3 : index
    %18 = memref.load %arg1[%c3] : memref<10xf32, #tpu.memory_space<smem>>
    %19 = vector.broadcast %17 : f32 to vector<8x128xf32>
    %20 = arith.mulf %1, %19 : vector<8x128xf32>
    %21 = vector.broadcast %18 : f32 to vector<8x128xf32>
    %22 = arith.mulf %3, %21 : vector<8x128xf32>
    %23 = arith.addf %20, %22 : vector<8x128xf32>
    %c1_10 = arith.constant 1 : index
    %24 = memref.load %arg2[%c1_10] : memref<5xf32, #tpu.memory_space<smem>>
    %25 = vector.broadcast %24 : f32 to vector<8x128xf32>
    %26 = arith.addf %23, %25 : vector<8x128xf32>
    %c1_11 = arith.constant 1 : index
    %c0_12 = arith.constant 0 : index
    %c0_13 = arith.constant 0 : index
    %27 = vector.load %arg4[%c1_11, %c0_12, %c0_13] : memref<5x8x128xf32, #tpu.memory_space<vmem>>, vector<1x8x128xf32>
    %28 = vector.shape_cast %27 : vector<1x8x128xf32> to vector<8x128xf32>
    %29 = vector.shape_cast %26 : vector<8x128xf32> to vector<1x8x128xf32>
    tpu.vector_store %arg4[%c1_11, %c0_12, %c0_13], %29 {strides = array<i32>} : memref<5x8x128xf32, #tpu.memory_space<vmem>>, vector<1x8x128xf32>,
    %c4 = arith.constant 4 : index
    %30 = memref.load %arg1[%c4] : memref<10xf32, #tpu.memory_space<smem>>
    %c5 = arith.constant 5 : index
    %31 = memref.load %arg1[%c5] : memref<10xf32, #tpu.memory_space<smem>>
    %32 = vector.broadcast %30 : f32 to vector<8x128xf32>
    %33 = arith.mulf %1, %32 : vector<8x128xf32>
    %34 = vector.broadcast %31 : f32 to vector<8x128xf32>
    %35 = arith.mulf %3, %34 : vector<8x128xf32>
    %36 = arith.addf %33, %35 : vector<8x128xf32>
    %c2_14 = arith.constant 2 : index
    %37 = memref.load %arg2[%c2_14] : memref<5xf32, #tpu.memory_space<smem>>
    %38 = vector.broadcast %37 : f32 to vector<8x128xf32>
    %39 = arith.addf %36, %38 : vector<8x128xf32>
    %c2_15 = arith.constant 2 : index
    %c0_16 = arith.constant 0 : index
    %c0_17 = arith.constant 0 : index
    %40 = vector.load %arg4[%c2_15, %c0_16, %c0_17] : memref<5x8x128xf32, #tpu.memory_space<vmem>>, vector<1x8x128xf32>
    %41 = vector.shape_cast %40 : vector<1x8x128xf32> to vector<8x128xf32>
    %42 = vector.shape_cast %39 : vector<8x128xf32> to vector<1x8x128xf32>
    tpu.vector_store %arg4[%c2_15, %c0_16, %c0_17], %42 {strides = array<i32>} : memref<5x8x128xf32, #tpu.memory_space<vmem>>, vector<1x8x128xf32>,
    %c6 = arith.constant 6 : index
    %43 = memref.load %arg1[%c6] : memref<10xf32, #tpu.memory_space<smem>>
    %c7 = arith.constant 7 : index
    %44 = memref.load %arg1[%c7] : memref<10xf32, #tpu.memory_space<smem>>
    %45 = vector.broadcast %43 : f32 to vector<8x128xf32>
    %46 = arith.mulf %1, %45 : vector<8x128xf32>
    %47 = vector.broadcast %44 : f32 to vector<8x128xf32>
    %48 = arith.mulf %3, %47 : vector<8x128xf32>
    %49 = arith.addf %46, %48 : vector<8x128xf32>
    %c3_18 = arith.constant 3 : index
    %50 = memref.load %arg2[%c3_18] : memref<5xf32, #tpu.memory_space<smem>>
    %51 = vector.broadcast %50 : f32 to vector<8x128xf32>
    %52 = arith.addf %49, %51 : vector<8x128xf32>
    %c3_19 = arith.constant 3 : index
    %c0_20 = arith.constant 0 : index
    %c0_21 = arith.constant 0 : index
    %53 = vector.load %arg4[%c3_19, %c0_20, %c0_21] : memref<5x8x128xf32, #tpu.memory_space<vmem>>, vector<1x8x128xf32>
    %54 = vector.shape_cast %53 : vector<1x8x128xf32> to vector<8x128xf32>
    %55 = vector.shape_cast %52 : vector<8x128xf32> to vector<1x8x128xf32>
    tpu.vector_store %arg4[%c3_19, %c0_20, %c0_21], %55 {strides = array<i32>} : memref<5x8x128xf32, #tpu.memory_space<vmem>>, vector<1x8x128xf32>,
    %c8 = arith.constant 8 : index
    %56 = memref.load %arg1[%c8] : memref<10xf32, #tpu.memory_space<smem>>
    %c9 = arith.constant 9 : index
    %57 = memref.load %arg1[%c9] : memref<10xf32, #tpu.memory_space<smem>>
    %58 = vector.broadcast %56 : f32 to vector<8x128xf32>
    %59 = arith.mulf %1, %58 : vector<8x128xf32>
    %60 = vector.broadcast %57 : f32 to vector<8x128xf32>
    %61 = arith.mulf %3, %60 : vector<8x128xf32>
    %62 = arith.addf %59, %61 : vector<8x128xf32>
    %c4_22 = arith.constant 4 : index
    %63 = memref.load %arg2[%c4_22] : memref<5xf32, #tpu.memory_space<smem>>
    %64 = vector.broadcast %63 : f32 to vector<8x128xf32>
    %65 = arith.addf %62, %64 : vector<8x128xf32>
    %c4_23 = arith.constant 4 : index
    %c0_24 = arith.constant 0 : index
    %c0_25 = arith.constant 0 : index
    %66 = vector.load %arg4[%c4_23, %c0_24, %c0_25] : memref<5x8x128xf32, #tpu.memory_space<vmem>>, vector<1x8x128xf32>
    %67 = vector.shape_cast %66 : vector<1x8x128xf32> to vector<8x128xf32>
    %68 = vector.shape_cast %65 : vector<8x128xf32> to vector<1x8x128xf32>
    tpu.vector_store %arg4[%c4_23, %c0_24, %c0_25], %68 {strides = array<i32>} : memref<5x8x128xf32, #tpu.memory_space<vmem>>, vector<1x8x128xf32>,
    return
  }
  func.func @transform_0(%arg0: i32) -> i32 {
    %c0_i32 = arith.constant 0 : i32
    %c0_i32_0 = arith.constant 0 : i32
    return %c0_i32 : i32
  }
  func.func @transform_1(%arg0: i32) -> i32 {
    %c0_i32 = arith.constant 0 : i32
    %c0_i32_0 = arith.constant 0 : i32
    return %c0_i32 : i32
  }
  func.func @transform_2(%arg0: i32) -> (i32, i32, i32) {
    %c0_i32 = arith.constant 0 : i32
    %c0_i32_0 = arith.constant 0 : i32
    %c0_i32_1 = arith.constant 0 : i32
    return %c0_i32, %arg0, %c0_i32_0 : i32, i32, i32
  }
  func.func @transform_3(%arg0: i32) -> (i32, i32, i32) {
    %c0_i32 = arith.constant 0 : i32
    %c0_i32_0 = arith.constant 0 : i32
    %c0_i32_1 = arith.constant 0 : i32
    return %c0_i32, %arg0, %c0_i32_0 : i32, i32, i32
  }
}

</mosaic_0001>

<llo_original>
// kernel: tpu_custom_call.1
$region0: #{tpu_custom_call.1}
  #allocation0 [shape = 'u32[]', space=smem, size = 0x4, offset = 0x4, fixed_abs, tag = 'smem constant byte address 0x4 - core index']
  #allocation1 [shape = 'u32[144,128]{1,0:T(1,128)}', space=vmem, size = 0x12000, scoped, tag = 'internal scratch']
  %s0 = inlined_call_operand.hbm [shape: f32[10], index: 0, kind: input, shape index: {}]
  %s1 = inlined_call_operand.vmem [shape: f32[5], index: 1, kind: input, shape index: {}]
  %s2 = inlined_call_operand.hbm [shape: f32[2,8,128], index: 2, kind: input, shape index: {}]
  %s3 = inlined_call_operand.hbm [shape: f32[5,8,128], index: 3, kind: output, shape index: {}]
  %s4 = sld [smem:[#allocation0]]
  $region34: #{tpu_custom_call.1} parent=0
    _
  %s6 = ssub.s32 1, %s4
  %s7 = scalar_select 0, %s6, %s4
  $region1: #{tpu_custom_call.1} parent=0
    #allocation2 [shape = 'u8[512]{0}', space=smem, size = 0x200, scoped, tag = 'input window, operand 0, single buffered']
    #allocation3 [shape = 's32[1]{0}', space=sflag, size = 0x4, scoped, tag = 'scoped memory for tpu_custom_call.1']
    #allocation4 [shape = 's32[1]{0}', space=sflag, size = 0x4, scoped, tag = 'scoped memory for tpu_custom_call.1']
    #allocation5 [shape = 's32[1]{0}', space=sflag, size = 0x4, scoped, tag = 'scoped memory for tpu_custom_call.1']
    #allocation6 [shape = 's32[1]{0}', space=sflag, size = 0x4, scoped, tag = 'scoped memory for tpu_custom_call.1']
    #allocation7 [shape = 'u8[512]{0}', space=smem, size = 0x200, scoped, tag = 'input window, operand 1, single buffered']
    #allocation8 [shape = 'u8[8192]{0}', space=vmem, size = 0x2000, scoped, tag = 'input window, operand 2, single buffered']
    #allocation9 [shape = 'u8[20480]{0}', space=vmem, size = 0x5000, scoped, tag = 'output window, operand 0, single buffered']
    %8 = vsyncpa [#allocation5], 0
    %9 = vsyncpa [#allocation6], 0
    %10 = vsyncpa [#allocation3], 0
    %11 = vsyncpa [#allocation4], 0
    // Predicated region
    $region2: #{tpu_custom_call.1} parent=1 // pred_check
      _
    $region3: #{tpu_custom_call.1} parent=1 // pred_check_branch
      %13 = sbr.rel (0) target = $region5
    $region4: #{tpu_custom_call.1} parent=1 // pred_region
      %s15 = ssub.s32 16, 16
      %16 = vsyncadd [#allocation5], %s15
      %19 = dma.hbm_to_smem %s0, 16, [#allocation2], [#allocation5]
    $region5: #{tpu_custom_call.1} parent=1 // pred_fallthru
      _
    // Predicated region
    $region6: #{tpu_custom_call.1} parent=1 // pred_check
      _
    $region7: #{tpu_custom_call.1} parent=1 // pred_check_branch
      %21 = sbr.rel (0) target = $region9
    $region8: #{tpu_custom_call.1} parent=1 // pred_region
      %s23 = ssub.s32 16, 16
      %24 = vsyncadd [#allocation6], %s23
      %s26 = sshll.u32 %s1, 4
      %s27 = int_to_ptr.vmem [resolvable:$true] %s26
      %29 = dma.vmem_to_smem %s27, 16, [#allocation7], [#allocation6]
    $region9: #{tpu_custom_call.1} parent=1 // pred_fallthru
      _
    // Predicated region
    $region10: #{tpu_custom_call.1} parent=1 // pred_check
      _
    $region11: #{tpu_custom_call.1} parent=1 // pred_check_branch
      %31 = sbr.rel (0) target = $region13
    $region12: #{tpu_custom_call.1} parent=1 // pred_region
      %s33 = ssub.s32 256, 256
      %34 = vsyncadd [#allocation3], %s33
      %s35 = sshll.u32 [#allocation8], 4
      %s36 = int_to_ptr.vmem [resolvable:$true] %s35
      %41 = dma.hbm_to_vmem [thread:$0]  %s2, 256, %s36, [#allocation3], 128, 128, 8
    $region13: #{tpu_custom_call.1} parent=1 // pred_fallthru
      _
    // Predicated region
    $region14: #{tpu_custom_call.1} parent=1 // pred_check
      _
    $region15: #{tpu_custom_call.1} parent=1 // pred_check_branch
      %43 = sbr.rel (0) target = $region17
    $region16: #{tpu_custom_call.1} parent=1 // pred_region
      %44 = dma.done [#allocation5], 16
    $region17: #{tpu_custom_call.1} parent=1 // pred_fallthru
      _
    // Predicated region
    $region18: #{tpu_custom_call.1} parent=1 // pred_check
      _
    $region19: #{tpu_custom_call.1} parent=1 // pred_check_branch
      %46 = sbr.rel (0) target = $region21
    $region20: #{tpu_custom_call.1} parent=1 // pred_region
      %47 = dma.done [#allocation6], 16
    $region21: #{tpu_custom_call.1} parent=1 // pred_fallthru
      _
    // Predicated region
    $region22: #{tpu_custom_call.1} parent=1 // pred_check
      _
    $region23: #{tpu_custom_call.1} parent=1 // pred_check_branch
      %49 = sbr.rel (0) target = $region25
    $region24: #{tpu_custom_call.1} parent=1 // pred_region
      %50 = dma.done [#allocation3], 256
    $region25: #{tpu_custom_call.1} parent=1 // pred_fallthru
      _
    %51 = sfence
    %v52 = vld [vmem:[#allocation8] sm:$0xff]
    %s53 = scalar_lea.vmem [#allocation8], 8
    %v54 = vld [vmem:[%s53] sm:$0xff]
    %s55 = sld [smem:[#allocation2]]
    %s56 = sld [smem:[#allocation2 + $0x1]]
    %v57 = vstv %s55
    %v58 = vmul.f32 %v52, %v57
    %v59 = vstv %s56
    %v60 = vmul.f32 %v54, %v59
    %v61 = vadd.f32 %v58, %v60
    %s62 = sld [smem:[#allocation7]]
    %v63 = vstv %s62
    %v64 = vadd.f32 %v61, %v63
    %65 = vst [vmem:[#allocation9] sm:$0xff] %v64
    %s66 = sld [smem:[#allocation2 + $0x2]]
    %s67 = sld [smem:[#allocation2 + $0x3]]
    %v68 = vstv %s66
    %v69 = vmul.f32 %v52, %v68
    %v70 = vstv %s67
    %v71 = vmul.f32 %v54, %v70
    %v72 = vadd.f32 %v69, %v71
    %s73 = sld [smem:[#allocation7 + $0x1]]
    %v74 = vstv %s73
    %v75 = vadd.f32 %v72, %v74
    %s76 = scalar_lea.vmem [#allocation9], 8
    %77 = vst [vmem:[%s76] sm:$0xff] %v75
    %s78 = sld [smem:[#allocation2 + $0x4]]
    %s79 = sld [smem:[#allocation2 + $0x5]]
    %v80 = vstv %s78
    %v81 = vmul.f32 %v52, %v80
    %v82 = vstv %s79
    %v83 = vmul.f32 %v54, %v82
    %v84 = vadd.f32 %v81, %v83
    %s85 = sld [smem:[#allocation7 + $0x2]]
    %v86 = vstv %s85
    %v87 = vadd.f32 %v84, %v86
    %s88 = scalar_lea.vmem [#allocation9], 16
    %89 = vst [vmem:[%s88] sm:$0xff] %v87
    %s90 = sld [smem:[#allocation2 + $0x6]]
    %s91 = sld [smem:[#allocation2 + $0x7]]
    %v92 = vstv %s90
    %v93 = vmul.f32 %v52, %v92
    %v94 = vstv %s91
    %v95 = vmul.f32 %v54, %v94
    %v96 = vadd.f32 %v93, %v95
    %s97 = sld [smem:[#allocation7 + $0x3]]
    %v98 = vstv %s97
    %v99 = vadd.f32 %v96, %v98
    %s100 = scalar_lea.vmem [#allocation9], 24
    %101 = vst [vmem:[%s100] sm:$0xff] %v99
    %s102 = sld [smem:[#allocation2 + $0x8]]
    %s103 = sld [smem:[#allocation2 + $0x9]]
    %v104 = vstv %s102
    %v105 = vmul.f32 %v52, %v104
    %v106 = vstv %s103
    %v107 = vmul.f32 %v54, %v106
    %v108 = vadd.f32 %v105, %v107
    %s109 = sld [smem:[#allocation7 + $0x4]]
    %v110 = vstv %s109
    %v111 = vadd.f32 %v108, %v110
    %s112 = scalar_lea.vmem [#allocation9], 32
    %113 = vst [vmem:[%s112] sm:$0xff] %v111
    // Predicated region
    $region26: #{tpu_custom_call.1} parent=1 // pred_check
      _
    $region27: #{tpu_custom_call.1} parent=1 // pred_check_branch
      %115 = sbr.rel (0) target = $region29
    $region28: #{tpu_custom_call.1} parent=1 // pred_region
      %s117 = ssub.s32 640, 640
      %118 = vsyncadd [#allocation4], %s117
      %s119 = sshll.u32 [#allocation9], 4
      %s120 = int_to_ptr.vmem [resolvable:$true] %s119
      %125 = dma.vmem_to_hbm [thread:$0]  %s120, 640, %s3, [#allocation4], 128, 128, 8
    $region29: #{tpu_custom_call.1} parent=1 // pred_fallthru
      _
    // Predicated region
    $region30: #{tpu_custom_call.1} parent=1 // pred_check
      _
    $region31: #{tpu_custom_call.1} parent=1 // pred_check_branch
      %127 = sbr.rel (0) target = $region33
    $region32: #{tpu_custom_call.1} parent=1 // pred_region
      %128 = dma.done [#allocation4], 640
    $region33: #{tpu_custom_call.1} parent=1 // pred_fallthru
      _
    %129 = vsyncpa [#allocation3], 1
    %130 = vsyncpa [#allocation4], 1
    %131 = vsyncpa [#allocation5], 1
    %132 = vsyncpa [#allocation6], 1

</llo_original>
